<compile_context>
chip_gen: v7x
topology: tpu7x:2x2x1
jax: 0.10.0
libtpu: 0.0.40
codegen_flags: <defaults>
</compile_context>

<pallas_src>
import functools
import math

import jax
import jax.numpy as jnp
from jax.experimental import pallas as pl
from jax.experimental.pallas import tpu as pltpu

EPS = 1e-07
LANE = 128


def _nce_kernel(x_ref, out_ref, acc_ref, *, kpn_eps, n_cols, m_valid,
                rows_per_block, blocks_per_core):
    """x_ref: (rows_per_block, 128) lane-dense tile of row-major-flattened x."""
    c = pl.program_id(0)          # core slot          ("parallel")
    t = pl.program_id(1)          # streaming blocks   ("arbitrary")

    @pl.when(t == 0)
    def _():
        acc_ref[...] = jnp.zeros_like(acc_ref)

    tr = rows_per_block
    blk = c * blocks_per_core + t                      # logical (unclamped) block id
    base = blk * (tr * LANE)                           # flat index of tile element (0,0)
    local = (jax.lax.broadcasted_iota(jnp.int32, (tr, LANE), 0) * LANE
             + jax.lax.broadcasted_iota(jnp.int32, (tr, LANE), 1))
    idx = base + local                                 # flat row-major index into x
    valid = idx < m_valid                              # masks pad, partial & redundant blocks
    # column 0 of the original (B, K+1) tensor  <=>  flat index % (K+1) == 0
    phase = (n_cols - base % n_cols) % n_cols          # scalar
    is_pos = jnp.logical_and(valid, (local % n_cols) == phase)

    x = x_ref[...].astype(jnp.float32)
    ln_den = jnp.log(x + kpn_eps)                      # log of every denominator
    ln_pos = jnp.log(jnp.where(is_pos, x, 1.0))        # log(x[:,0]); exactly 0 elsewhere
    contrib = jnp.where(valid, ln_den, 0.0) - ln_pos

    # Accumulate per-(sublane,lane) partial sums (cheap VPU adds); the XLU
    # cross-lane reduce happens only once, in the finalize step.
    if tr % 8 == 0:
        acc_ref[...] += contrib.reshape(tr // 8, 8, LANE).sum(axis=0)
    else:  # tiny array: single block equal to the full (rows,128) array
        acc_ref[0:1, :] += jnp.sum(contrib, axis=0, keepdims=True)

    @pl.when(t == pl.num_programs(1) - 1)
    def _():
        out_ref[...] = jnp.sum(acc_ref[...], keepdims=True)   # (1,1) per core slot


@functools.partial(jax.jit, static_argnums=(2,),
                   static_argnames=("target_block_bytes",))
def nce_criterion_loss(x, targets, nLem, *, target_block_bytes=4 * 1024 * 1024):
    """JAX/Pallas equivalent of NCECriterion(nLem).forward(x, targets).

    `targets` is accepted for API parity but (as in the PyTorch module) unused.
    Returns a float32 array of shape (1,).
    """
    del targets  # unused by the reference forward()
    B, N = x.shape
    K = N - 1
    kpn = K / float(nLem)                              # K * Pn  (Pnt == Pns == 1/nLem)
    M = B * N

    # Lane-dense view of x WITHOUT a transpose: row-major flatten + reshape is a
    # free bitcast when B*(K+1) is a multiple of 128; otherwise pad the flat
    # vector (padding is masked out in-kernel, no analytic correction needed).
    if M % LANE == 0:
        m_store = M
        flat = x.reshape(-1)
    else:
        m_store = ((M + 8 * LANE - 1) // (8 * LANE)) * (8 * LANE)
        flat = jnp.pad(x.reshape(-1), (0, m_store - M), constant_values=1.0)
    rows = m_store // LANE
    x2 = flat.reshape(rows, LANE)

    # Tiling: (tr, 128) f32 blocks, ~4 MiB each (double-buffered 8 MiB -> safe
    # on every generation's default scoped VMEM). Fully dense vregs.
    tr = max(8, (target_block_bytes // (LANE * 4)) // 8 * 8)
    tr = min(tr, rows)                                 # full-dim block for tiny inputs
    total_blocks = -(-rows // tr)
    num_cores = 2 if total_blocks >= 2 else 1          # v7x megacore; harmless on v5e/v6e
    bpc = -(-total_blocks // num_cores)                # blocks per core slot

    if num_cores * bpc == total_blocks:
        in_index = lambda c, t: (c * bpc + t, 0)
    else:  # odd split: clamp the redundant tail block (its contribution is masked to 0)
        in_index = lambda c, t: (jnp.minimum(c * bpc + t, total_blocks - 1), 0)

    partials = pl.pallas_call(
        functools.partial(_nce_kernel, kpn_eps=kpn + EPS, n_cols=N, m_valid=M,
                          rows_per_block=tr, blocks_per_core=bpc),
        out_shape=jax.ShapeDtypeStruct((num_cores, 1, 1), jnp.float32),
        grid_spec=pltpu.PrefetchScalarGridSpec(
            num_scalar_prefetch=0,
            grid=(num_cores, bpc),
            in_specs=[pl.BlockSpec((tr, LANE), in_index)],
            out_specs=pl.BlockSpec((None, 1, 1), lambda c, t: (c, 0, 0)),
            scratch_shapes=[pltpu.VMEM((8, LANE), jnp.float32)],
        ),
        compiler_params=pltpu.CompilerParams(
            dimension_semantics=("parallel", "arbitrary")),
        cost_estimate=pl.CostEstimate(
            flops=8 * m_store,
            transcendentals=2 * m_store,
            bytes_accessed=m_store * x.dtype.itemsize + 4 * num_cores),
    )(x2)

    # Epilogue on (num_cores,) scalars: fold in 1/B and the K*log(K*Pn) constant.
    k_log_term = K * math.log(kpn) if K > 0 else 0.0
    loss = jnp.sum(partials) * (1.0 / float(B)) - k_log_term
    return loss.astype(jnp.float32).reshape(1)


def _reference_loss(x, nLem):
    # Pure-JAX reference mirroring the PyTorch code, for the correctness check.
    B = x.shape[0]
    K = x.shape[1] - 1
    Pn = 1.0 / float(nLem)
    Pmt = x[:, 0]
    lnPmt = jnp.log(Pmt / (Pmt + K * Pn + EPS))
    Pon_div = x[:, 1:] + K * Pn + EPS
    lnPon = jnp.log((K * Pn) / Pon_div)
    return (-(jnp.sum(lnPmt) + jnp.sum(lnPon)) / B).reshape(1)


if __name__ == "__main__":
    nLem = 4096          # memory-bank size (module __init__ arg)
    batch = 8
    K = 4                # number of noise samples -> x has K+1 columns

    key = jax.random.PRNGKey(0)
    kx, kt = jax.random.split(key)
    # "probabilities" produced by an NCE head: positive values in (0, 1)
    x = jax.random.uniform(kx, (batch, K + 1), dtype=jnp.float32,
                           minval=1e-4, maxval=1.0)
    targets = jax.random.randint(kt, (batch,), 0, nLem)  # unused, parity only

    loss = nce_criterion_loss(x, targets, nLem)
    loss = jax.block_until_ready(loss)

    ref = _reference_loss(x, nLem)
    assert loss.shape == (1,)
    assert jnp.allclose(loss, ref, rtol=1e-5, atol=1e-5), (loss, ref)

    print("KERNEL_OK")
</pallas_src>

<mosaic_0001>
module attributes {stable_mosaic.version = 11 : i64} {
  func.func @_nce_kernel(%arg0: i32, %arg1: i32, %arg2: memref<8x128xf32, #tpu.memory_space<vmem>>, %arg3: memref<1x1x1xf32, #tpu.memory_space<vmem>>, %arg4: memref<8x128xf32, #tpu.memory_space<vmem>>) attributes {dimension_semantics = [#tpu.dimension_semantics<parallel>, #tpu.dimension_semantics<arbitrary>], iteration_bounds = array<i64: 1, 1>, scalar_prefetch = 0 : i64, scratch_operands = 1 : i64, tpu.core_type = #tpu.core_type<tc>, window_params = [{transform_indices = @transform_0, window_bounds = array<i64: 8, 128>}, {transform_indices = @transform_1, window_bounds = array<i64: 1, 1, 1>}]} {
    %c0_i32 = arith.constant 0 : i32
    %0 = arith.cmpi eq, %arg1, %c0_i32 : i32
    %1 = arith.extui %0 : i1 to i32
    %c0_i32_0 = arith.constant 0 : i32
    %2 = arith.cmpi ne, %1, %c0_i32_0 : i32
    scf.if %2 {
      %cst_29 = arith.constant 0.000000e+00 : f32
      %73 = vector.broadcast %cst_29 : f32 to vector<8x128xf32>
      %c0_30 = arith.constant 0 : index
      %c0_31 = arith.constant 0 : index
      %74 = vector.load %arg4[%c0_30, %c0_31] : memref<8x128xf32, #tpu.memory_space<vmem>>, vector<8x128xf32>
      tpu.vector_store %arg4[%c0_30, %c0_31], %73 {strides = array<i32>} : memref<8x128xf32, #tpu.memory_space<vmem>>, vector<8x128xf32>,
    } else {
    }
    %c1_i32 = arith.constant 1 : i32
    %3 = arith.muli %arg0, %c1_i32 : i32
    %4 = arith.addi %3, %arg1 : i32
    %c1024_i32 = arith.constant 1024 : i32
    %5 = arith.muli %4, %c1024_i32 : i32
    %6 = tpu.iota {dimensions = array<i32: 0>} : vector<8x128xi32>
    %c128_i32 = arith.constant 128 : i32
    %7 = vector.broadcast %c128_i32 : i32 to vector<8x128xi32>
    %8 = arith.muli %6, %7 : vector<8x128xi32>
    %9 = tpu.iota {dimensions = array<i32: 1>} : vector<8x128xi32>
    %10 = arith.addi %8, %9 : vector<8x128xi32>
    %11 = vector.broadcast %5 : i32 to vector<8x128xi32>
    %12 = arith.addi %11, %10 : vector<8x128xi32>
    %c40_i32 = arith.constant 40 : i32
    %13 = vector.broadcast %c40_i32 : i32 to vector<8x128xi32>
    %14 = arith.cmpi slt, %12, %13 : vector<8x128xi32>
    %c5_i32 = arith.constant 5 : i32
    %c0_i32_1 = arith.constant 0 : i32
    %15 = arith.cmpi eq, %c5_i32, %c0_i32_1 : i32
    %c1_i32_2 = arith.constant 1 : i32
    %16 = arith.select %15, %c1_i32_2, %c5_i32 : i32
    %17 = arith.remsi %5, %16 : i32
    %c0_i32_3 = arith.constant 0 : i32
    %18 = arith.cmpi ne, %17, %c0_i32_3 : i32
    %c0_i32_4 = arith.constant 0 : i32
    %19 = arith.cmpi slt, %17, %c0_i32_4 : i32
    %c0_i32_5 = arith.constant 0 : i32
    %20 = arith.cmpi slt, %16, %c0_i32_5 : i32
    %21 = arith.xori %19, %20 : i1
    %22 = arith.andi %21, %18 : i1
    %23 = arith.addi %17, %16 : i32
    %24 = arith.select %22, %23, %17 : i32
    %c5_i32_6 = arith.constant 5 : i32
    %25 = arith.subi %c5_i32_6, %24 : i32
    %c5_i32_7 = arith.constant 5 : i32
    %c0_i32_8 = arith.constant 0 : i32
    %26 = arith.cmpi eq, %c5_i32_7, %c0_i32_8 : i32
    %c1_i32_9 = arith.constant 1 : i32
    %27 = arith.select %26, %c1_i32_9, %c5_i32_7 : i32
    %28 = arith.remsi %25, %27 : i32
    %c0_i32_10 = arith.constant 0 : i32
    %29 = arith.cmpi ne, %28, %c0_i32_10 : i32
    %c0_i32_11 = arith.constant 0 : i32
    %30 = arith.cmpi slt, %28, %c0_i32_11 : i32
    %c0_i32_12 = arith.constant 0 : i32
    %31 = arith.cmpi slt, %27, %c0_i32_12 : i32
    %32 = arith.xori %30, %31 : i1
    %33 = arith.andi %32, %29 : i1
    %34 = arith.addi %28, %27 : i32
    %35 = arith.select %33, %34, %28 : i32
    %c5_i32_13 = arith.constant 5 : i32
    %c0_i32_14 = arith.constant 0 : i32
    %36 = arith.cmpi eq, %c5_i32_13, %c0_i32_14 : i32
    %c1_i32_15 = arith.constant 1 : i32
    %37 = arith.select %36, %c1_i32_15, %c5_i32_13 : i32
    %38 = vector.broadcast %37 : i32 to vector<8x128xi32>
    %39 = arith.remsi %10, %38 : vector<8x128xi32>
    %c0_i32_16 = arith.constant 0 : i32
    %40 = vector.broadcast %c0_i32_16 : i32 to vector<8x128xi32>
    %41 = arith.cmpi ne, %39, %40 : vector<8x128xi32>
    %c0_i32_17 = arith.constant 0 : i32
    %42 = vector.broadcast %c0_i32_17 : i32 to vector<8x128xi32>
    %43 = arith.cmpi slt, %39, %42 : vector<8x128xi32>
    %c0_i32_18 = arith.constant 0 : i32
    %44 = arith.cmpi slt, %37, %c0_i32_18 : i32
    %45 = vector.broadcast %44 : i1 to vector<8x128xi1>
    %46 = vector.broadcast %45 : vector<8x128xi1> to vector<8x128xi1>
    %47 = arith.xori %43, %46 : vector<8x128xi1>
    %48 = arith.andi %47, %41 : vector<8x128xi1>
    %49 = vector.broadcast %37 : i32 to vector<8x128xi32>
    %50 = arith.addi %39, %49 : vector<8x128xi32>
    %51 = arith.select %48, %50, %39 : vector<8x128xi1>, vector<8x128xi32>
    %52 = vector.broadcast %35 : i32 to vector<8x128xi32>
    %53 = arith.cmpi eq, %51, %52 : vector<8x128xi32>
    %54 = arith.andi %14, %53 : vector<8x128xi1>
    %c0 = arith.constant 0 : index
    %c0_19 = arith.constant 0 : index
    %55 = vector.load %arg2[%c0, %c0_19] : memref<8x128xf32, #tpu.memory_space<vmem>>, vector<8x128xf32>
    %cst = arith.constant 9.766625E-4 : f32
    %56 = vector.broadcast %cst : f32 to vector<8x128xf32>
    %57 = arith.addf %55, %56 : vector<8x128xf32>
    %58 = math.log %57 : vector<8x128xf32>
    %cst_20 = arith.constant 1.000000e+00 : f32
    %59 = vector.broadcast %cst_20 : f32 to vector<8x128xf32>
    %60 = arith.select %54, %55, %59 : vector<8x128xi1>, vector<8x128xf32>
    %61 = math.log %60 : vector<8x128xf32>
    %cst_21 = arith.constant 0.000000e+00 : f32
    %62 = vector.broadcast %cst_21 : f32 to vector<8x128xf32>
    %63 = arith.select %14, %58, %62 : vector<8x128xi1>, vector<8x128xf32>
    %64 = arith.subf %63, %61 : vector<8x128xf32>
    %c0_22 = arith.constant 0 : index
    %c0_23 = arith.constant 0 : index
    %65 = vector.load %arg4[%c0_22, %c0_23] : memref<8x128xf32, #tpu.memory_space<vmem>>, vector<8x128xf32>
    %66 = vector.shape_cast %64 : vector<8x128xf32> to vector<1x8x128xf32>
    %cst_24 = arith.constant dense<0.000000e+00> : vector<8x128xf32>
    %67 = vector.multi_reduction <add>, %66, %cst_24 [0] : vector<1x8x128xf32> to vector<8x128xf32>
    %68 = arith.addf %65, %67 : vector<8x128xf32>
    %c0_25 = arith.constant 0 : index
    %c0_26 = arith.constant 0 : index
    %69 = vector.load %arg4[%c0_25, %c0_26] : memref<8x128xf32, #tpu.memory_space<vmem>>, vector<8x128xf32>
    tpu.vector_store %arg4[%c0_25, %c0_26], %68 {strides = array<i32>} : memref<8x128xf32, #tpu.memory_space<vmem>>, vector<8x128xf32>,
    %c0_i32_27 = arith.constant 0 : i32
    %70 = arith.cmpi eq, %arg1, %c0_i32_27 : i32
    %71 = arith.extui %70 : i1 to i32
    %c0_i32_28 = arith.constant 0 : i32
    %72 = arith.cmpi ne, %71, %c0_i32_28 : i32
    scf.if %72 {
      %c0_29 = arith.constant 0 : index
      %c0_30 = arith.constant 0 : index
      %73 = vector.load %arg4[%c0_29, %c0_30] : memref<8x128xf32, #tpu.memory_space<vmem>>, vector<8x128xf32>
      %74 = vector.shape_cast %73 : vector<8x128xf32> to vector<1x8x128xf32>
      %cst_31 = arith.constant dense<0.000000e+00> : vector<1xf32>
      %75 = vector.multi_reduction <add>, %74, %cst_31 [1, 2] : vector<1x8x128xf32> to vector<1xf32>
      %76 = vector.shape_cast %75 : vector<1xf32> to vector<1x1x1xf32>
      %77 = vector.extract %76[0, 0, 0] : f32 from vector<1x1x1xf32>
      %78 = vector.broadcast %77 : f32 to vector<1x1xf32>
      %c0_32 = arith.constant 0 : index
      %c0_33 = arith.constant 0 : index
      %c0_34 = arith.constant 0 : index
      %79 = vector.load %arg3[%c0_32, %c0_33, %c0_34] : memref<1x1x1xf32, #tpu.memory_space<vmem>>, vector<1x1x1xf32>
      %80 = vector.shape_cast %79 : vector<1x1x1xf32> to vector<1x1xf32>
      %81 = vector.shape_cast %78 : vector<1x1xf32> to vector<1x1x1xf32>
      tpu.vector_store %arg3[%c0_32, %c0_33, %c0_34], %81 {strides = array<i32>} : memref<1x1x1xf32, #tpu.memory_space<vmem>>, vector<1x1x1xf32>,
    } else {
    }
    return
  }
  func.func @transform_0(%arg0: i32, %arg1: i32) -> (i32, i32) {
    %c1_i32 = arith.constant 1 : i32
    %0 = arith.muli %arg0, %c1_i32 : i32
    %1 = arith.addi %0, %arg1 : i32
    %c0_i32 = arith.constant 0 : i32
    %c0_i32_0 = arith.constant 0 : i32
    return %1, %c0_i32 : i32, i32
  }
  func.func @transform_1(%arg0: i32, %arg1: i32) -> (i32, i32, i32) {
    %c0_i32 = arith.constant 0 : i32
    %c0_i32_0 = arith.constant 0 : i32
    %c0_i32_1 = arith.constant 0 : i32
    return %arg0, %c0_i32, %c0_i32_0 : i32, i32, i32
  }
}

</mosaic_0001>

<llo_original>
// kernel: nce_criterion_loss.1
$region0: #{nce_criterion_loss.1}
  #allocation0 [shape = 'u32[]', space=smem, size = 0x4, offset = 0x4, fixed_abs, tag = 'smem constant byte address 0x4 - core index']
  #allocation1 [shape = 'u32[144,128]{1,0:T(1,128)}', space=vmem, size = 0x12000, scoped, tag = 'internal scratch']
  #allocation2 [shape = 'f32[8,128]{1,0:T(8,128)}', space=vmem, size = 0x1000, scoped, tag = 'scratch operand']
  %s0 = inlined_call_operand.vmem [shape: f32[8,128], index: 0, kind: input, shape index: {}]
  %s1 = inlined_call_operand.hbm [shape: f32[1,1,1], index: 1, kind: output, shape index: {}]
  %s2 = sld [smem:[#allocation0]]
  $region22: #{nce_criterion_loss.1} parent=0
    _
  %s4 = ssub.s32 1, %s2
  %s5 = scalar_select 0, %s4, %s2
  $region1: #{nce_criterion_loss.1} parent=0
    #allocation3 [shape = 'u8[512]{0}', space=vmem, size = 0x400, scoped, tag = 'output window, operand 0, single buffered']
    #allocation4 [shape = 's32[1]{0}', space=sflag, size = 0x4, scoped, tag = 'scoped memory for nce_criterion_loss.1']
    %6 = vsyncpa [#allocation4], 0
    // Predicated region
    $region2: #{nce_criterion_loss.1} parent=1 // pred_check
      _
    $region3: #{nce_criterion_loss.1} parent=1 // pred_check_branch
      %8 = sbr.rel (0) target = $region5
    $region4: #{nce_criterion_loss.1} parent=1 // pred_region
      %s9 = sadd.s32 0, 0
      %p10 = scmp.lt.s32.totalorder %s9, 0
      %s11 = scalar_select %p10, %s9, 0
      %s12 = smul.addr %s11, 8
      %s13 = scalar_lea.vmem %s0, %s12
      %s14 = sadd.s32 0, 0
    $region5: #{nce_criterion_loss.1} parent=1 // pred_fallthru
      _
    %s15 = sadd.s32 0, 0
    %p16 = scmp.lt.s32.totalorder %s15, 0
    %s17 = scalar_select %p16, %s15, 0
    %s18 = smul.addr %s17, 8
    %s19 = scalar_lea.vmem %s0, %s18
    %s20 = sadd.s32 0, 0
    %p21 = scmp.lt.s32.totalorder %s20, 0
    %s22 = scalar_select %p21, %s20, 0
    %s23 = smul.addr %s22, 8
    %s24 = scalar_lea.vmem %s0, %s23
    %s25 = sadd.s32 0, 0
    %p26 = scmp.eq.s32.totalorder 0, 0
    // Predicated region
    $region6: #{nce_criterion_loss.1} parent=1 // pred_check
      %p27 = pneg %p26
    $region7: #{nce_criterion_loss.1} parent=1 // pred_check_branch
      %29 = sbr.rel (%p27) target = $region9
    $region8: #{nce_criterion_loss.1} parent=1 // pred_region
      %30 = vst [vmem:[#allocation2] sm:$0xff] 0.0
    $region9: #{nce_criterion_loss.1} parent=1 // pred_fallthru
      _
    %s31 = sadd.s32 0, 0
    %s32 = smul.u32 %s31, 1024
    %v33 = vlaneseq
    %v34 = vshrl.u32 %v33, 7
    %v35 = vmul.u32 %v34, 128
    %v36 = vlaneseq
    %v37 = vand.u32 %v36, 127
    %v38 = vadd.s32 %v35, %v37
    %v39 = vstv %s32
    %v40 = vadd.s32 %v39, %v38
    %vm41 = vcmp.lt.s32.totalorder %v40, 40
    %p42 = scmp.lt.s32.totalorder %s32, 0
    %s43 = ssub.s32 0, %s32
    %s44 = scalar_select %p42, %s43, %s32
    %s45 = sdiv.u32.pop %s44, 5
    %s46 = srem.u32.pop %s44, 5
    %s47 = ssub.s32 0, %s46
    %s48 = scalar_select %p42, %s47, %s46
    %p49 = scmp.ne.s32.totalorder %s48, 0
    %p50 = scmp.lt.s32.totalorder %s48, 0
    %p51 = pnand %p50, %p49
    %p52 = pneg %p51
    %s53 = sadd.s32 %s48, 5
    %s54 = scalar_select %p52, %s53, %s48
    %s55 = ssub.s32 5, %s54
    %p56 = scmp.lt.s32.totalorder %s55, 0
    %s57 = ssub.s32 0, %s55
    %s58 = scalar_select %p56, %s57, %s55
    %s59 = sdiv.u32.pop %s58, 5
    %s60 = srem.u32.pop %s58, 5
    %s61 = ssub.s32 0, %s60
    %s62 = scalar_select %p56, %s61, %s60
    %p63 = scmp.ne.s32.totalorder %s62, 0
    %p64 = scmp.lt.s32.totalorder %s62, 0
    %p65 = pnand %p64, %p63
    %p66 = pneg %p65
    %s67 = sadd.s32 %s62, 5
    %s68 = scalar_select %p66, %s67, %s62
    %vm69 = vcmp.lt.s32.totalorder %v38, 0
    %v70 = vsub.s32 0, %v38
    %v71 = vsel %vm69, %v70, %v38
    %v72 = vmul.u32.u64.compose %v71, 3435973837
    %v73 = vextract.low.u32 %v72
    %v74 = vextract.high.u32 %v72
    %v75 = vshrl.u32 %v74, 2
    %v76 = vmul.u32 %v75, 5
    %v77 = vsub.s32 %v71, %v76
    %v78 = vsub.s32 0, %v77
    %v79 = vsel %vm69, %v78, %v77
    %vm80 = vcmp.ne.s32.totalorder %v79, 0
    %vm81 = vcmp.lt.s32.totalorder %v79, 0
    %vm82 = vmand %vm81, %vm80
    %v83 = vadd.s32 %v79, 5
    %v84 = vsel %vm82, %v83, %v79
    %v85 = vstv %s68
    %vm86 = vcmp.eq.s32.totalorder %v84, %v85
    %vm87 = vmand %vm41, %vm86
    %v88 = vld [vmem:[%s24] sm:$0xff]
    %v89 = vadd.f32 %v88, 0.0009766625
    %v90 = vlog2.pop %v89
    %v91 = vmul.f32 %v90, 0.6931472
    %v92 = vsel %vm87, %v88, 1.0
    %v93 = vlog2.pop %v92
    %v94 = vmul.f32 %v93, 0.6931472
    %v95 = vsel %vm41, %v91, 0.0
    %v96 = vsub.f32 %v95, %v94
    %v97 = vld [vmem:[#allocation2] sm:$0xff]
    %v98 = vadd.f32 %v96, 0.0
    %v99 = vadd.f32 %v97, %v98
    %100 = vst [vmem:[#allocation2] sm:$0xff] %v99
    // Predicated region
    $region10: #{nce_criterion_loss.1} parent=1 // pred_check
      %p101 = pneg %p26
    $region11: #{nce_criterion_loss.1} parent=1 // pred_check_branch
      %103 = sbr.rel (%p101) target = $region13
    $region12: #{nce_criterion_loss.1} parent=1 // pred_region
      %v104 = vld [vmem:[#allocation2] sm:$0xff]
      %105 = vadd.xlane.f32.xlu0 %v104
      %v106 = vpop.xlane.xlu0 %105
      %v107 = vrot.slane %v106, 4
      %v108 = vadd.f32 %v106, %v107
      %v109 = vrot.slane %v108, 2
      %v110 = vadd.f32 %v108, %v109
      %v111 = vrot.slane %v110, 1
      %v112 = vadd.f32 %v110, %v111
      %s113 = vtos %v112
      %v114 = vstv %s113
      %vm115 = vcmask 0
      %116 = vst.msk [vmem:[#allocation3] sm:$0x1] %vm115, %v114
    $region13: #{nce_criterion_loss.1} parent=1 // pred_fallthru
      _
    // Predicated region
    $region14: #{nce_criterion_loss.1} parent=1 // pred_check
      _
    $region15: #{nce_criterion_loss.1} parent=1 // pred_check_branch
      %118 = sbr.rel (0) target = $region17
    $region16: #{nce_criterion_loss.1} parent=1 // pred_region
      %s120 = ssub.s32 16, 16
      %121 = vsyncadd [#allocation4], %s120
      %s123 = sshll.u32 [#allocation3], 4
      %s124 = int_to_ptr.vmem [resolvable:$true] %s123
      %126 = dma.vmem_to_hbm [thread:$0]  %s124, 16, %s1, [#allocation4]
    $region17: #{nce_criterion_loss.1} parent=1 // pred_fallthru
      _
    // Predicated region
    $region18: #{nce_criterion_loss.1} parent=1 // pred_check
      _
    $region19: #{nce_criterion_loss.1} parent=1 // pred_check_branch
      %128 = sbr.rel (0) target = $region21
    $region20: #{nce_criterion_loss.1} parent=1 // pred_region
      %129 = dma.done [#allocation4], 16
    $region21: #{nce_criterion_loss.1} parent=1 // pred_fallthru
      _
    %130 = vsyncpa [#allocation4], 1

</llo_original>
